<compile_context>
chip_gen: v7x
topology: tpu7x:2x2x1
jax: 0.10.0
libtpu: 0.0.40
codegen_flags: <defaults>
</compile_context>

<pallas_src>
import math
import numpy as np
import jax
import jax.numpy as jnp
from jax.experimental import pallas as pl
from jax.experimental.pallas import tpu as pltpu

# ----- static hyperparameters from the original script -----
EMBED_DIM = 32                   # embedDimension
NUM_NEURONS = 128                # numNeurons
ALL_WINDOW_SIZES = [1, 2, 4, 8]  # allWindowSizes_new
NUM_W = len(ALL_WINDOW_SIZES)
WINDOW_MAX = 8                   # windowMAX
SEQ_LEN = 8                      # tokens per forward step
TEMPERATURE = 1.0                # temperature (reference path only)
OUT_SCALE = 1.0 + 0.5 / NUM_W    # ctx + 0.5*raw  ==  OUT_SCALE*combo_sum + 1


def inn_kernel(x_ref, nwT_ref, wfold_ref, rowpack_ref, out_ref):
    """x_ref:(S,E)  nwT:(E,N) f32  wfold:(WINDOW_MAX*N,N) bf16  rowpack:(8,N) f32
       out:(1,N) f32."""
    S = x_ref.shape[0]
    N = NUM_NEURONS

    n_bias = rowpack_ref[0:1, :]     # (1, N)  neuron biases
    out_bias = rowpack_ref[1:2, :]   # (1, N)  OUT_SCALE*sum(combo_b) + 1.0

    # ---------------- NEURON: tanh(x @ W.T + b) ----------------
    # clamp(-5, 5) omitted: tanh output is already bounded in [-1, 1].
    act = jnp.tanh(
        jnp.dot(x_ref[...], nwT_ref[...], preferred_element_type=jnp.float32)
        + n_bias)                                              # (S, N) f32

    # ------- folded window-means + combo Linears + output blend -------
    # Everything downstream of `act` collapses (host-side folding) to:
    #     out = flatten(last WINDOW_MAX rows of act) @ wfold + out_bias
    # Flatten is done as a lane-axis concat of static row slices (layout
    # friendly, no in-kernel reshape); S < WINDOW_MAX is handled by a static
    # slice of wfold rows (padding rows would contribute exactly zero).
    k = min(S, WINDOW_MAX)
    rows = [act[S - k + t: S - k + t + 1, :] for t in range(k)]
    tail_flat = jnp.concatenate(rows, axis=1).astype(wfold_ref.dtype)  # (1, k*N)
    wf = wfold_ref[(WINDOW_MAX - k) * N:, :]                            # (k*N, N)

    out_ref[...] = (
        jnp.dot(tail_flat, wf, preferred_element_type=jnp.float32) + out_bias)


def init_params(key):
    ks = jax.random.split(key, 10)
    bN = 1.0 / math.sqrt(NUM_NEURONS)
    return dict(
        n_weights=0.01 * jax.random.normal(ks[0], (NUM_NEURONS, EMBED_DIM),
                                           jnp.float32),
        n_biases=jnp.zeros((NUM_NEURONS,), jnp.float32),
        # perturbed so the "attention path is a no-op" claim is actually tested:
        cerebellum=jnp.ones((NUM_W,), jnp.float32)
                   + 0.1 * jax.random.normal(ks[7], (NUM_W,), jnp.float32),
        combo_w=jax.random.uniform(ks[1], (NUM_W, NUM_NEURONS, NUM_NEURONS),
                                   jnp.float32, -bN, bN),
        combo_b=jax.random.uniform(ks[2], (NUM_W, NUM_NEURONS),
                                   jnp.float32, -bN, bN),
        q_w=jax.random.uniform(ks[3], (EMBED_DIM, NUM_NEURONS),
                               jnp.float32, -bN, bN),
        q_b=jax.random.uniform(ks[4], (EMBED_DIM,), jnp.float32, -bN, bN),
        k_w=jax.random.uniform(ks[5], (EMBED_DIM, NUM_NEURONS),
                               jnp.float32, -bN, bN),
        k_b=jax.random.uniform(ks[6], (EMBED_DIM,), jnp.float32, -bN, bN),
        judge_bias=0.1 * jax.random.normal(ks[8], (NUM_W,), jnp.float32),
        credibility_bias=0.1 * jax.random.normal(ks[9], (NUM_W,), jnp.float32),
        parliament_blend=jnp.array(0.5, jnp.float32),
    )


def prepare_params(P):
    """ONE-TIME folding of parameters into kernel-ready layout (init time,
    never per forward call)."""
    N = NUM_NEURONS
    win = jnp.asarray(ALL_WINDOW_SIZES, jnp.float32)
    # mask_scaled[i, t] = (t < windowSize_i) / windowSize_i      (W, WINDOW_MAX)
    mask_scaled = ((jnp.arange(WINDOW_MAX, dtype=jnp.int32)[None, :]
                    < jnp.asarray(ALL_WINDOW_SIZES, jnp.int32)[:, None]
                    ).astype(jnp.float32) / win[:, None])

    # combo_sum = sum_i (mask_scaled[i] @ padded) @ combo_w[i].T + combo_b[i]
    #           = padded_flat @ wfold_raw + cb_sum
    # with wfold_raw[t*N + m, n] = sum_i mask_scaled[i, t] * combo_w[i][n, m]
    cwT = jnp.transpose(P['combo_w'], (0, 2, 1))              # (W, N_in, N_out)
    wfold = jnp.einsum('wt,wmn->tmn', mask_scaled, cwT)       # (WINDOW_MAX, N, N)
    # fold the final  ctx + 0.5*raw = OUT_SCALE*combo_sum + 1  scaling in too;
    # bf16 for the dominant weight (f32 accumulation in-kernel).
    wfold = (OUT_SCALE * wfold).reshape(WINDOW_MAX * N, N).astype(jnp.bfloat16)

    cb_sum = jnp.sum(P['combo_b'], axis=0)                    # (N,)
    # softmax(blended).sum() == 1 exactly -> attention/parliament path only
    # contributes "+1.0"; fold it into the output bias.
    out_bias = OUT_SCALE * cb_sum + 1.0                        # (N,)

    rowpack = jnp.zeros((8, N), jnp.float32)
    rowpack = rowpack.at[0, :].set(P['n_biases'])
    rowpack = rowpack.at[1, :].set(out_bias)

    return dict(
        nwT=jnp.asarray(P['n_weights'].T),   # (E, N)  f32 (tiny; feeds tanh)
        wfold=wfold,                         # (WINDOW_MAX*N, N)  bf16
        rowpack=rowpack,                     # (8, N)  f32
    )


def interneuron_network_forward_batched(xb, prep):
    """Batch of B independent forwards: xb (B, S, E) -> (B, 1, N).
    Grid over B with parallel semantics (uses both v7x TensorCores); weights
    use constant index_maps so they stay VMEM-resident across grid steps."""
    B, S, E = xb.shape
    N = NUM_NEURONS
    KN = WINDOW_MAX * N
    return pl.pallas_call(
        inn_kernel,
        out_shape=jax.ShapeDtypeStruct((B, 1, N), jnp.float32),
        grid=(B,),
        in_specs=[
            pl.BlockSpec((None, S, E), lambda b: (b, 0, 0)),   # per-step input
            pl.BlockSpec((E, N), lambda b: (0, 0)),            # resident weight
            pl.BlockSpec((KN, N), lambda b: (0, 0)),           # resident weight
            pl.BlockSpec((8, N), lambda b: (0, 0)),            # resident biases
        ],
        out_specs=pl.BlockSpec((None, 1, N), lambda b: (b, 0, 0)),
        compiler_params=pltpu.CompilerParams(
            dimension_semantics=("parallel",)),
    )(xb, prep['nwT'], prep['wfold'], prep['rowpack'])


def interneuron_network_forward(x, prep):
    """Single-sequence forward matching the PyTorch module: (S, E) -> (1, N)."""
    return interneuron_network_forward_batched(x[None], prep)[0]


def reference_forward(x, P):
    """Pure-JAX mirror of the full PyTorch forward (attention path included)."""
    act = jnp.clip(jnp.tanh(x @ P['n_weights'].T + P['n_biases']), -5.0, 5.0)
    S = act.shape[0]
    k = min(S, WINDOW_MAX)
    padded = jnp.zeros((WINDOW_MAX, NUM_NEURONS), jnp.float32)
    padded = padded.at[WINDOW_MAX - k:].set(act[S - k:])
    win = jnp.asarray(ALL_WINDOW_SIZES, jnp.float32)
    mask = (jnp.arange(WINDOW_MAX)[None, :] < win[:, None]).astype(jnp.float32)
    sums = (padded[None, :, :] * mask[:, :, None]).sum(axis=1)
    means = sums / win[:, None]
    combo = jnp.stack([means[i] @ P['combo_w'][i].T + P['combo_b'][i]
                       for i in range(NUM_W)], axis=0)
    query = (combo @ P['q_w'].T + P['q_b']
             + (P['judge_bias'] * P['cerebellum'])[:, None])
    key_ = (means @ P['k_w'].T + P['k_b']
            + (P['credibility_bias'] * P['cerebellum'])[:, None])
    scores = (query @ key_.T) / TEMPERATURE
    self_sc = jnp.diag(scores)
    combined = self_sc + (scores.sum(axis=0) - self_sc)
    p = jax.nn.sigmoid(P['parliament_blend'])
    blended = ((1.0 - p) * P['cerebellum'] + p * combined) * P['cerebellum']
    wts = jax.nn.softmax(blended, axis=0)
    ctx = jnp.sum(combo + wts[:, None], axis=0, keepdims=True)
    raw = combo.mean(axis=0, keepdims=True)
    return ctx + 0.5 * raw


if __name__ == "__main__":
    key = jax.random.PRNGKey(0)
    pkey, xkey = jax.random.split(key)
    P = init_params(pkey)
    prep = prepare_params(P)          # one-time parameter folding (init time)

    BATCH = 4
    xb = jax.random.normal(xkey, (BATCH, SEQ_LEN, EMBED_DIM), jnp.float32)

    outb = jax.block_until_ready(interneuron_network_forward_batched(xb, prep))
    assert outb.shape == (BATCH, 1, NUM_NEURONS)

    out1 = jax.block_until_ready(interneuron_network_forward(xb[0], prep))
    assert out1.shape == (1, NUM_NEURONS)

    # validate against the full (attention-path-included) reference
    for b in range(BATCH):
        ref = reference_forward(xb[b], P)
        np.testing.assert_allclose(np.asarray(outb[b]), np.asarray(ref),
                                   rtol=2e-3, atol=2e-3)
    np.testing.assert_allclose(np.asarray(out1), np.asarray(outb[0]),
                               rtol=1e-6, atol=1e-6)
    print("KERNEL_OK")
</pallas_src>

<mosaic_0001>
module attributes {stable_mosaic.version = 11 : i64} {
  func.func @inn_kernel(%arg0: i32, %arg1: memref<1x8x32xf32, #tpu.memory_space<vmem>>, %arg2: memref<32x128xf32, #tpu.memory_space<vmem>>, %arg3: memref<1024x128xbf16, #tpu.memory_space<vmem>>, %arg4: memref<8x128xf32, #tpu.memory_space<vmem>>, %arg5: memref<1x1x128xf32, #tpu.memory_space<vmem>>) attributes {dimension_semantics = [#tpu.dimension_semantics<parallel>], iteration_bounds = array<i64: 4>, scalar_prefetch = 0 : i64, scratch_operands = 0 : i64, tpu.core_type = #tpu.core_type<tc>, window_params = [{transform_indices = @transform_0, window_bounds = array<i64: 1, 8, 32>}, {pipeline_mode = #tpu.pipeline_mode<synchronous>, transform_indices = @transform_1, window_bounds = array<i64: 32, 128>}, {pipeline_mode = #tpu.pipeline_mode<synchronous>, transform_indices = @transform_2, window_bounds = array<i64: 1024, 128>}, {pipeline_mode = #tpu.pipeline_mode<synchronous>, transform_indices = @transform_3, window_bounds = array<i64: 8, 128>}, {transform_indices = @transform_4, window_bounds = array<i64: 1, 1, 128>}]} {
    %c0 = arith.constant 0 : index
    %c0_0 = arith.constant 0 : index
    %0 = vector.load %arg4[%c0, %c0_0] : memref<8x128xf32, #tpu.memory_space<vmem>>, vector<1x128xf32>
    %c1 = arith.constant 1 : index
    %c0_1 = arith.constant 0 : index
    %1 = vector.load %arg4[%c1, %c0_1] : memref<8x128xf32, #tpu.memory_space<vmem>>, vector<1x128xf32>
    %c0_2 = arith.constant 0 : index
    %c0_3 = arith.constant 0 : index
    %c0_4 = arith.constant 0 : index
    %2 = vector.load %arg1[%c0_2, %c0_3, %c0_4] : memref<1x8x32xf32, #tpu.memory_space<vmem>>, vector<1x8x32xf32>
    %3 = vector.shape_cast %2 : vector<1x8x32xf32> to vector<8x32xf32>
    %c0_5 = arith.constant 0 : index
    %c0_6 = arith.constant 0 : index
    %4 = vector.load %arg2[%c0_5, %c0_6] : memref<32x128xf32, #tpu.memory_space<vmem>>, vector<32x128xf32>
    %cst = arith.constant dense<0.000000e+00> : vector<8x128xf32>
    %5 = tpu.matmul %3, %4, %cst {dimension_numbers = #tpu.dot_dimension_numbers<[1], [0], [0], [1], [0, 0, 1, 1], [], []>} : vector<8x32xf32>, vector<32x128xf32>, vector<8x128xf32> -> vector<8x128xf32>
    %6 = vector.broadcast %0 : vector<1x128xf32> to vector<8x128xf32>
    %7 = arith.addf %5, %6 : vector<8x128xf32>
    %8 = math.tanh %7 : vector<8x128xf32>
    %9 = vector.extract_strided_slice %8 {offsets = [0, 0], sizes = [1, 128], strides = [1, 1]} : vector<8x128xf32> to vector<1x128xf32>
    %10 = vector.extract_strided_slice %8 {offsets = [1, 0], sizes = [1, 128], strides = [1, 1]} : vector<8x128xf32> to vector<1x128xf32>
    %11 = vector.extract_strided_slice %8 {offsets = [2, 0], sizes = [1, 128], strides = [1, 1]} : vector<8x128xf32> to vector<1x128xf32>
    %12 = vector.extract_strided_slice %8 {offsets = [3, 0], sizes = [1, 128], strides = [1, 1]} : vector<8x128xf32> to vector<1x128xf32>
    %13 = vector.extract_strided_slice %8 {offsets = [4, 0], sizes = [1, 128], strides = [1, 1]} : vector<8x128xf32> to vector<1x128xf32>
    %14 = vector.extract_strided_slice %8 {offsets = [5, 0], sizes = [1, 128], strides = [1, 1]} : vector<8x128xf32> to vector<1x128xf32>
    %15 = vector.extract_strided_slice %8 {offsets = [6, 0], sizes = [1, 128], strides = [1, 1]} : vector<8x128xf32> to vector<1x128xf32>
    %16 = vector.extract_strided_slice %8 {offsets = [7, 0], sizes = [1, 128], strides = [1, 1]} : vector<8x128xf32> to vector<1x128xf32>
    %17 = tpu.concatenate %9, %10, %11, %12, %13, %14, %15, %16 in 1 : vector<1x128xf32>, vector<1x128xf32>, vector<1x128xf32>, vector<1x128xf32>, vector<1x128xf32>, vector<1x128xf32>, vector<1x128xf32>, vector<1x128xf32> -> vector<1x1024xf32>
    %18 = arith.truncf %17 : vector<1x1024xf32> to vector<1x1024xbf16>
    %c0_7 = arith.constant 0 : index
    %c0_8 = arith.constant 0 : index
    %19 = vector.load %arg3[%c0_7, %c0_8] : memref<1024x128xbf16, #tpu.memory_space<vmem>>, vector<1024x128xbf16>
    %cst_9 = arith.constant dense<0.000000e+00> : vector<1x128xf32>
    %20 = tpu.matmul %18, %19, %cst_9 {dimension_numbers = #tpu.dot_dimension_numbers<[1], [0], [0], [1], [0, 0, 1, 1], [], []>} : vector<1x1024xbf16>, vector<1024x128xbf16>, vector<1x128xf32> -> vector<1x128xf32>
    %21 = arith.addf %20, %1 : vector<1x128xf32>
    %c0_10 = arith.constant 0 : index
    %c0_11 = arith.constant 0 : index
    %c0_12 = arith.constant 0 : index
    %22 = vector.load %arg5[%c0_10, %c0_11, %c0_12] : memref<1x1x128xf32, #tpu.memory_space<vmem>>, vector<1x1x128xf32>
    %23 = vector.shape_cast %22 : vector<1x1x128xf32> to vector<1x128xf32>
    %24 = vector.shape_cast %21 : vector<1x128xf32> to vector<1x1x128xf32>
    tpu.vector_store %arg5[%c0_10, %c0_11, %c0_12], %24 {strides = array<i32>} : memref<1x1x128xf32, #tpu.memory_space<vmem>>, vector<1x1x128xf32>,
    return
  }
  func.func @transform_0(%arg0: i32) -> (i32, i32, i32) {
    %c0_i32 = arith.constant 0 : i32
    %c0_i32_0 = arith.constant 0 : i32
    %c0_i32_1 = arith.constant 0 : i32
    return %arg0, %c0_i32, %c0_i32_0 : i32, i32, i32
  }
  func.func @transform_1(%arg0: i32) -> (i32, i32) {
    %c0_i32 = arith.constant 0 : i32
    %c0_i32_0 = arith.constant 0 : i32
    %c0_i32_1 = arith.constant 0 : i32
    return %c0_i32, %c0_i32_0 : i32, i32
  }
  func.func @transform_2(%arg0: i32) -> (i32, i32) {
    %c0_i32 = arith.constant 0 : i32
    %c0_i32_0 = arith.constant 0 : i32
    %c0_i32_1 = arith.constant 0 : i32
    return %c0_i32, %c0_i32_0 : i32, i32
  }
  func.func @transform_3(%arg0: i32) -> (i32, i32) {
    %c0_i32 = arith.constant 0 : i32
    %c0_i32_0 = arith.constant 0 : i32
    %c0_i32_1 = arith.constant 0 : i32
    return %c0_i32, %c0_i32_0 : i32, i32
  }
  func.func @transform_4(%arg0: i32) -> (i32, i32, i32) {
    %c0_i32 = arith.constant 0 : i32
    %c0_i32_0 = arith.constant 0 : i32
    %c0_i32_1 = arith.constant 0 : i32
    return %arg0, %c0_i32, %c0_i32_0 : i32, i32, i32
  }
}

</mosaic_0001>

<llo_original>
// kernel: tpu_custom_call.1
$region0: #{tpu_custom_call.1}
  #allocation0 [shape = 'u32[]', space=smem, size = 0x4, offset = 0x4, fixed_abs, tag = 'smem constant byte address 0x4 - core index']
  #allocation1 [shape = 'u32[144,128]{1,0:T(1,128)}', space=vmem, size = 0x12000, scoped, tag = 'internal scratch']
  %s0 = inlined_call_operand.hbm [shape: f32[4,8,32], index: 0, kind: input, shape index: {}]
  %s1 = inlined_call_operand.hbm [shape: f32[32,128], index: 1, kind: input, shape index: {}]
  %s2 = inlined_call_operand.hbm [shape: bf16[1024,128], index: 2, kind: input, shape index: {}]
  %s3 = inlined_call_operand.vmem [shape: f32[8,128], index: 3, kind: input, shape index: {}]
  %s4 = inlined_call_operand.hbm [shape: f32[4,1,128], index: 4, kind: output, shape index: {}]
  %s5 = sld [smem:[#allocation0]]
  $region61: #{tpu_custom_call.1} parent=0
    _
  %s7 = ssub.s32 1, %s5
  %s8 = scalar_select 0, %s7, %s5
  $region1: #{tpu_custom_call.1} parent=0
    #allocation2 [shape = 'u8[8192]{0}', space=vmem, size = 0x2000, scoped, tag = 'input window, operand 0']
    #allocation3 [shape = 's32[2]{0}', space=sflag, size = 0x8, scoped, tag = 'scoped memory for tpu_custom_call.1']
    #allocation4 [shape = 's32[2]{0}', space=sflag, size = 0x8, scoped, tag = 'scoped memory for tpu_custom_call.1']
    #allocation5 [shape = 'u8[16384]{0}', space=vmem, size = 0x4000, scoped, tag = 'input window, operand 1, single buffered']
    #allocation6 [shape = 's32[1]{0}', space=sflag, size = 0x4, scoped, tag = 'scoped memory for tpu_custom_call.1']
    #allocation7 [shape = 'u8[262144]{0}', space=vmem, size = 0x40000, scoped, tag = 'input window, operand 2, single buffered']
    #allocation8 [shape = 'u8[1024]{0}', space=vmem, size = 0x400, scoped, tag = 'output window, operand 0']
    %9 = vsyncpa [#allocation3], 0
    %s10 = scalar_lea.sflag [#allocation3], 1
    %11 = vsyncpa %s10, 0
    %12 = vsyncpa [#allocation6], 0
    %13 = vsyncpa [#allocation4], 0
    %s14 = scalar_lea.sflag [#allocation4], 1
    %15 = vsyncpa %s14, 0
    loop: start=0, step=1, limit=6
    $region2: #{tpu_custom_call.1} parent=1 // loop_pre_header
      _
    $region3: #{tpu_custom_call.1} parent=1 // loop_header
      %s17 = sphi 0, %s21
      %p18 = scmp.ge.s32.totalorder %s17, 6
      %s27 = sphi 0, %s29
      %s30 = sphi 0, %s27
      %s31 = sphi 0, %s30
      %s47 = sphi 0, %s31
      %s51 = sphi 0, %s51
      %s53 = sphi 0, %s51
      %s54 = sphi 0, %s53
      %s68 = sphi 0, %s54
      %s72 = sphi 0, %s72
      %s74 = sphi 0, %s72
      %s75 = sphi 0, %s74
      %s89 = sphi 0, %s75
      %s93 = sphi 0, %s93
      %s95 = sphi 0, %s93
      %s96 = sphi 0, %s95
      %s110 = sphi 0, %s96
      %s116 = sphi 0, %s118
      %s119 = sphi 0, %s116
      %s120 = sphi 0, %s119
      %s136 = sphi 0, %s120
    $region4: #{tpu_custom_call.1} parent=1 // loop_header_branch
      %20 = sbr.rel (%p18) target = $region8
    $region5: #{tpu_custom_call.1} parent=1 // loop_body
      %s22 = ssub.s32 %s17, 1
      %s23 = ssub.s32 %s17, 2
      %s24 = sadd.s32 %s17, 1
      %s25 = ssub.s32 %s17, %s24
      %p26 = scmp.eq.s32.totalorder %s25, 0
      %s28 = sadd.s32 %s27, 1
      %s29 = scalar_select %p26, %s27, %s28
      %p32 = pneg %p26
      %p33 = scmp.eq.s32.totalorder %s17, 3
      %p34 = por %p32, %p33
      %p35 = scmp.ne.s32.totalorder %s27, %s30
      %p36 = scmp.eq.s32.totalorder %s17, 0
      %p37 = por %p35, %p36
      %p38 = scmp.ne.s32.totalorder %s27, %s30
      %p39 = scmp.eq.s32.totalorder %s22, 3
      %p40 = por %p38, %p39
      %p41 = scmp.ne.s32.totalorder %s30, %s31
      %p42 = scmp.eq.s32.totalorder %s22, 0
      %p43 = por %p41, %p42
      %p44 = scmp.ne.s32.totalorder %s30, %s31
      %p45 = scmp.eq.s32.totalorder %s23, 3
      %p46 = por %p44, %p45
      %p48 = scmp.ne.s32.totalorder %s31, %s47
      %p49 = scmp.eq.s32.totalorder %s23, 0
      %p50 = por %p48, %p49
      %s52 = sadd.s32 %s51, 1
      %p55 = scmp.eq.s32.totalorder %s17, 3
      %p56 = scmp.ne.s32.totalorder %s51, %s53
      %p57 = scmp.eq.s32.totalorder %s17, 0
      %p58 = por %p56, %p57
      %p59 = scmp.ne.s32.totalorder %s51, %s53
      %p60 = scmp.eq.s32.totalorder %s22, 3
      %p61 = por %p59, %p60
      %p62 = scmp.ne.s32.totalorder %s53, %s54
      %p63 = scmp.eq.s32.totalorder %s22, 0
      %p64 = por %p62, %p63
      %p65 = scmp.ne.s32.totalorder %s53, %s54
      %p66 = scmp.eq.s32.totalorder %s23, 3
      %p67 = por %p65, %p66
      %p69 = scmp.ne.s32.totalorder %s54, %s68
      %p70 = scmp.eq.s32.totalorder %s23, 0
      %p71 = por %p69, %p70
      %s73 = sadd.s32 %s72, 1
      %p76 = scmp.eq.s32.totalorder %s17, 3
      %p77 = scmp.ne.s32.totalorder %s72, %s74
      %p78 = scmp.eq.s32.totalorder %s17, 0
      %p79 = por %p77, %p78
      %p80 = scmp.ne.s32.totalorder %s72, %s74
      %p81 = scmp.eq.s32.totalorder %s22, 3
      %p82 = por %p80, %p81
      %p83 = scmp.ne.s32.totalorder %s74, %s75
      %p84 = scmp.eq.s32.totalorder %s22, 0
      %p85 = por %p83, %p84
      %p86 = scmp.ne.s32.totalorder %s74, %s75
      %p87 = scmp.eq.s32.totalorder %s23, 3
      %p88 = por %p86, %p87
      %p90 = scmp.ne.s32.totalorder %s75, %s89
      %p91 = scmp.eq.s32.totalorder %s23, 0
      %p92 = por %p90, %p91
      %s94 = sadd.s32 %s93, 1
      %p97 = scmp.eq.s32.totalorder %s17, 3
      %p98 = scmp.ne.s32.totalorder %s93, %s95
      %p99 = scmp.eq.s32.totalorder %s17, 0
      %p100 = por %p98, %p99
      %p101 = scmp.ne.s32.totalorder %s93, %s95
      %p102 = scmp.eq.s32.totalorder %s22, 3
      %p103 = por %p101, %p102
      %p104 = scmp.ne.s32.totalorder %s95, %s96
      %p105 = scmp.eq.s32.totalorder %s22, 0
      %p106 = por %p104, %p105
      %p107 = scmp.ne.s32.totalorder %s95, %s96
      %p108 = scmp.eq.s32.totalorder %s23, 3
      %p109 = por %p107, %p108
      %p111 = scmp.ne.s32.totalorder %s96, %s110
      %p112 = scmp.eq.s32.totalorder %s23, 0
      %p113 = por %p111, %p112
      %s114 = ssub.s32 %s17, %s24
      %p115 = scmp.eq.s32.totalorder %s114, 0
      %s117 = sadd.s32 %s116, 1
      %s118 = scalar_select %p115, %s116, %s117
      %p121 = pneg %p115
      %p122 = scmp.eq.s32.totalorder %s17, 3
      %p123 = por %p121, %p122
      %p124 = scmp.ne.s32.totalorder %s116, %s119
      %p125 = scmp.eq.s32.totalorder %s17, 0
      %p126 = por %p124, %p125
      %p127 = scmp.ne.s32.totalorder %s116, %s119
      %p128 = scmp.eq.s32.totalorder %s22, 3
      %p129 = por %p127, %p128
      %p130 = scmp.ne.s32.totalorder %s119, %s120
      %p131 = scmp.eq.s32.totalorder %s22, 0
      %p132 = por %p130, %p131
      %p133 = scmp.ne.s32.totalorder %s119, %s120
      %p134 = scmp.eq.s32.totalorder %s23, 3
      %p135 = por %p133, %p134
      %p137 = scmp.ne.s32.totalorder %s120, %s136
      %p138 = scmp.eq.s32.totalorder %s23, 0
      %p139 = por %p137, %p138
      %p140 = scmp.le.s32.totalorder 1, %s17
      %p141 = scmp.lt.s32.totalorder %s17, 5
      %p142 = pnand %p140, %p141
      %p143 = pneg %p142
      // Predicated region
      $region9: #{tpu_custom_call.1} parent=5 // pred_check
        _
      $region10: #{tpu_custom_call.1} parent=5 // pred_check_branch
        %145 = sbr.rel (%p142) target = $region12
      $region11: #{tpu_custom_call.1} parent=5 // pred_region
        %s146 = ssub.s32 %s17, 1
        // Predicated region
        $region13: #{tpu_custom_call.1} parent=11 // pred_check
          %p147 = pneg %p64
        $region14: #{tpu_custom_call.1} parent=11 // pred_check_branch
          %149 = sbr.rel (%p147) target = $region16
        $region15: #{tpu_custom_call.1} parent=11 // pred_region
          %s151 = ssub.s32 512, 512
          %152 = vsyncadd [#allocation6], %s151
          %s153 = sshll.u32 [#allocation5], 4
          %s154 = int_to_ptr.vmem [resolvable:$true] %s153
          %159 = dma.hbm_to_vmem [thread:$0]  %s1, 512, %s154, [#allocation6], 128, 128, 8
        $region16: #{tpu_custom_call.1} parent=11 // pred_fallthru
          _
        // Predicated region
        $region17: #{tpu_custom_call.1} parent=11 // pred_check
          %p160 = pneg %p85
        $region18: #{tpu_custom_call.1} parent=11 // pred_check_branch
          %162 = sbr.rel (%p160) target = $region20
        $region19: #{tpu_custom_call.1} parent=11 // pred_region
          %s164 = ssub.s32 8192, 8192
          %165 = vsyncadd [#allocation6], %s164
          %s166 = sshll.u32 [#allocation7], 4
          %s167 = int_to_ptr.vmem [resolvable:$true] %s166
          %172 = dma.hbm_to_vmem [thread:$0]  %s2, 8192, %s167, [#allocation6], 64, 64, 4
        $region20: #{tpu_custom_call.1} parent=11 // pred_fallthru
          _
        // Predicated region
        $region21: #{tpu_custom_call.1} parent=11 // pred_check
          %p173 = pneg %p106
        $region22: #{tpu_custom_call.1} parent=11 // pred_check_branch
          %175 = sbr.rel (%p173) target = $region24
        $region23: #{tpu_custom_call.1} parent=11 // pred_region
          _
        $region24: #{tpu_custom_call.1} parent=11 // pred_fallthru
          _
      $region12: #{tpu_custom_call.1} parent=5 // pred_fallthru
        _
      %p176 = scmp.lt.s32.totalorder %s17, 4
      // Predicated region
      $region25: #{tpu_custom_call.1} parent=5 // pred_check
        %p177 = pneg %p176
      $region26: #{tpu_custom_call.1} parent=5 // pred_check_branch
        %179 = sbr.rel (%p177) target = $region28
      $region27: #{tpu_custom_call.1} parent=5 // pred_region
        // Predicated region
        $region29: #{tpu_custom_call.1} parent=27 // pred_check
          %p180 = pneg %p37
        $region30: #{tpu_custom_call.1} parent=27 // pred_check_branch
          %182 = sbr.rel (%p180) target = $region32
        $region31: #{tpu_custom_call.1} parent=27 // pred_region
          %s183 = sand.u32 %s27, 1
          %s184 = scalar_lea.sflag [#allocation3], %s183
          %s185 = sand.u32 %s27, 1
          %s186 = smul.addr %s185, 8
          %s187 = scalar_lea.vmem [#allocation2], %s186
          %s189 = ssub.s32 128, 128
          %190 = vsyncadd %s184, %s189
          %s191 = smul.addr %s17, 128
          %s192 = scalar_lea.hbm %s0, %s191
          %s194 = sshll.u32 %s187, 4
          %s195 = int_to_ptr.vmem [resolvable:$true] %s194
          %197 = dma.hbm_to_vmem [thread:$0]  %s192, 128, %s195, %s184
        $region32: #{tpu_custom_call.1} parent=27 // pred_fallthru
          _
      $region28: #{tpu_custom_call.1} parent=5 // pred_fallthru
        _
      %p198 = scmp.le.s32.totalorder 1, %s17
      %p199 = scmp.lt.s32.totalorder %s17, 5
      %p200 = pnand %p198, %p199
      %p201 = pneg %p200
      // Predicated region
      $region33: #{tpu_custom_call.1} parent=5 // pred_check
        _
      $region34: #{tpu_custom_call.1} parent=5 // pred_check_branch
        %203 = sbr.rel (%p200) target = $region36
      $region35: #{tpu_custom_call.1} parent=5 // pred_region
        %s204 = ssub.s32 %s17, 1
        %s205 = sand.u32 %s30, 1
        %s206 = scalar_lea.sflag [#allocation3], %s205
        %s207 = sand.u32 %s30, 1
        %s208 = smul.addr %s207, 8
        %s209 = scalar_lea.vmem [#allocation2], %s208
        // Predicated region
        $region37: #{tpu_custom_call.1} parent=35 // pred_check
          %p210 = pneg %p43
        $region38: #{tpu_custom_call.1} parent=35 // pred_check_branch
          %212 = sbr.rel (%p210) target = $region40
        $region39: #{tpu_custom_call.1} parent=35 // pred_region
          %213 = dma.done %s206, 128
        $region40: #{tpu_custom_call.1} parent=35 // pred_fallthru
          _
        // Predicated region
        $region41: #{tpu_custom_call.1} parent=35 // pred_check
          %p214 = pneg %p64
        $region42: #{tpu_custom_call.1} parent=35 // pred_check_branch
          %216 = sbr.rel (%p214) target = $region44
        $region43: #{tpu_custom_call.1} parent=35 // pred_region
          %217 = dma.done [#allocation6], 512
        $region44: #{tpu_custom_call.1} parent=35 // pred_fallthru
          _
        // Predicated region
        $region45: #{tpu_custom_call.1} parent=35 // pred_check
          %p218 = pneg %p85
        $region46: #{tpu_custom_call.1} parent=35 // pred_check_branch
          %220 = sbr.rel (%p218) target = $region48
        $region47: #{tpu_custom_call.1} parent=35 // pred_region
          %221 = dma.done [#allocation6], 8192
        $region48: #{tpu_custom_call.1} parent=35 // pred_fallthru
          _
        %s222 = sand.u32 %s30, 1
        %s223 = scalar_lea.sflag [#allocation3], %s222
        %s224 = sand.u32 %s30, 1
        %s225 = smul.addr %s224, 8
        %s226 = scalar_lea.vmem [#allocation2], %s225
        %p227 = pneg %p43
        %p228 = pneg %p40
        %p229 = pneg %p64
        %p230 = pneg %p61
        %p231 = pneg %p85
        %p232 = pneg %p82
        %p233 = pneg %p106
        %p234 = pneg %p103
        %p235 = pneg %p132
        %p236 = pneg %p129
        %s237 = sand.u32 %s119, 1
        %s238 = scalar_lea.sflag [#allocation4], %s237
        %s239 = sand.u32 %s119, 1
        %s240 = scalar_lea.vmem [#allocation8], %s239
        %v242 = vld [vmem:[%s3] sm:$0x1]
        %v243 = vld [vmem:[%s3 + $0x1] sm:$0x1]
        %v244 = vld [vmem:[%s209] sm:$0xff]
        %v245 = vld [vmem:[#allocation5] sm:$0xff]
        %v246 = vld [vmem:[#allocation5 + $0x8] sm:$0xff]
        %v247 = vld [vmem:[#allocation5 + $0x10] sm:$0xff]
        %v248 = vld [vmem:[#allocation5 + $0x18] sm:$0xff]
        %v249 = vlaneseq
        %v250 = vshrl.u32 %v249, 7
        %v251 = vsub.s32 0, %v250
        %v252 = vrot.slane %v242, %v251
        %vm253 = vcmask 261120
        %v255 = vsel %vm253, %v244, 0
        %257 = vmatprep.subr.mxu0 0.0
        %258 = vmatpush1.msra.mxu0 %v245
        %259 = vmatprep.subr.mxu0 0.0
        %260 = vmatpush1.msra.mxu0 %v246
        %261 = vmatprep.subr.mxu0 0.0
        %262 = vmatpush1.msra.mxu0 %v247
        %263 = vmatprep.subr.mxu0 0.0
        %264 = vmatpush1.msra.mxu0 %v248
        %265 = vmatprep.subr.mxu0 0.0
        %266 = vmatpush1.msra.mxu0 0.0
        %267 = vmatprep.subr.mxu0 0.0
        %268 = vmatpush1.msra.mxu0 0.0
        %269 = vmatprep.subr.mxu0 0.0
        %270 = vmatpush1.msra.mxu0 0.0
        %271 = vmatprep.subr.mxu0 0.0
        %272 = vmatpush1.msra.mxu0 0.0
        %273 = vmatprep.subr.mxu0 0.0
        %274 = vmatpush1.msra.mxu0 0.0
        %275 = vmatprep.subr.mxu0 0.0
        %276 = vmatpush1.msra.mxu0 0.0
        %277 = vmatprep.subr.mxu0 0.0
        %278 = vmatpush1.msra.mxu0 0.0
        %279 = vmatprep.subr.mxu0 0.0
        %280 = vmatpush1.msra.mxu0 0.0
        %281 = vmatprep.subr.mxu0 0.0
        %282 = vmatpush1.msra.mxu0 0.0
        %283 = vmatprep.subr.mxu0 0.0
        %284 = vmatpush1.msra.mxu0 0.0
        %285 = vmatprep.subr.mxu0 0.0
        %286 = vmatpush1.msra.mxu0 0.0
        %287 = vmatprep.subr.mxu0 0.0
        %288 = vmatpush1.msra.mxu0 0.0
        %289 = vmatprep.subr.mxu0 0.0
        %290 = vmatpush1.msra.mxu0 0.0
        %291 = vmatprep.subr.mxu0 0.0
        %292 = vmatpush1.msra.mxu0 0.0
        %293 = vmatprep.subr.mxu0 0.0
        %294 = vmatpush1.msra.mxu0 0.0
        %295 = vmatprep.subr.mxu0 0.0
        %296 = vmatpush1.msra.mxu0 0.0
        %297 = vmatprep.subr.mxu0 0.0
        %298 = vmatpush1.msra.mxu0 0.0
        %299 = vmatprep.subr.mxu0 0.0
        %300 = vmatpush1.msra.mxu0 0.0
        %301 = vmatprep.subr.mxu0 0.0
        %302 = vmatpush1.msra.mxu0 0.0
        %303 = vmatprep.subr.mxu0 0.0
        %304 = vmatpush1.msra.mxu0 0.0
        %305 = vmatprep.subr.mxu0 0.0
        %306 = vmatpush1.msra.mxu0 0.0
        %307 = vmatprep.subr.mxu0 0.0
        %308 = vmatpush1.msra.mxu0 0.0
        %309 = vmatprep.subr.mxu0 0.0
        %310 = vmatpush1.msra.mxu0 0.0
        %311 = vmatprep.subr.mxu0 0.0
        %312 = vmatpush1.msra.mxu0 0.0
        %313 = vmatprep.subr.mxu0 0.0
        %314 = vmatpush1.msra.mxu0 0.0
        %315 = vmatprep.subr.mxu0 0.0
        %316 = vmatpush1.msra.mxu0 0.0
        %317 = vmatprep.subr.mxu0 0.0
        %318 = vmatpush1.msra.mxu0 0.0
        %319 = vmatprep.subr.mxu0 0.0
        %320 = vmatpush1.msra.mxu0 0.0
        %321 = vmatprep.mubr.f32.mxu0 0.0
        %322 = vmatmul.mubr.f32.gmra.mrb[0].mxu0 %v255
        %v323 = vpop.f32.mrb[0].mxu0
        %v324 = vadd.f32 %v252, %v323
        %v325 = vpop.f32.mrb[0].mxu0
        %326 = vdwg.mxu0
        %v327 = vtanh.pop %v324
        %v329 = vrot.slane %v327, 1
        %v331 = vrot.slane %v327, 2
        %v333 = vrot.slane %v327, 3
        %v335 = vrot.slane %v327, 4
        %v337 = vrot.slane %v327, 5
        %v339 = vrot.slane %v327, 6
        %v341 = vrot.slane %v327, 7
        %v343 = vpack.c.bf16 %v327, %v327
        %v344 = vpack.c.bf16 %v329, %v329
        %v345 = vpack.c.bf16 %v331, %v331
        %v346 = vpack.c.bf16 %v333, %v333
        %v347 = vpack.c.bf16 %v335, %v335
        %v348 = vpack.c.bf16 %v337, %v337
        %v349 = vpack.c.bf16 %v339, %v339
        %v350 = vpack.c.bf16 %v341, %v341
        %v351 = vld [vmem:[#allocation7] sm:$0xf]
        %v352 = vld [vmem:[#allocation7 + $0x4] sm:$0xf]
        %v353 = vld [vmem:[#allocation7 + $0x8] sm:$0xf]
        %v354 = vld [vmem:[#allocation7 + $0xc] sm:$0xf]
        %v355 = vld [vmem:[#allocation7 + $0x10] sm:$0xf]
        %v356 = vld [vmem:[#allocation7 + $0x14] sm:$0xf]
        %v357 = vld [vmem:[#allocation7 + $0x18] sm:$0xf]
        %v358 = vld [vmem:[#allocation7 + $0x1c] sm:$0xf]
        %v359 = vld [vmem:[#allocation7 + $0x20] sm:$0xf]
        %v360 = vld [vmem:[#allocation7 + $0x24] sm:$0xf]
        %v361 = vld [vmem:[#allocation7 + $0x28] sm:$0xf]
        %v362 = vld [vmem:[#allocation7 + $0x2c] sm:$0xf]
        %v363 = vld [vmem:[#allocation7 + $0x30] sm:$0xf]
        %v364 = vld [vmem:[#allocation7 + $0x34] sm:$0xf]
        %v365 = vld [vmem:[#allocation7 + $0x38] sm:$0xf]
        %v366 = vld [vmem:[#allocation7 + $0x3c] sm:$0xf]
        %v367 = vld [vmem:[#allocation7 + $0x40] sm:$0xf]
        %v368 = vld [vmem:[#allocation7 + $0x44] sm:$0xf]
        %v369 = vld [vmem:[#allocation7 + $0x48] sm:$0xf]
        %v370 = vld [vmem:[#allocation7 + $0x4c] sm:$0xf]
        %v371 = vld [vmem:[#allocation7 + $0x50] sm:$0xf]
        %v372 = vld [vmem:[#allocation7 + $0x54] sm:$0xf]
        %v373 = vld [vmem:[#allocation7 + $0x58] sm:$0xf]
        %v374 = vld [vmem:[#allocation7 + $0x5c] sm:$0xf]
        %v375 = vld [vmem:[#allocation7 + $0x60] sm:$0xf]
        %v376 = vld [vmem:[#allocation7 + $0x64] sm:$0xf]
        %v377 = vld [vmem:[#allocation7 + $0x68] sm:$0xf]
        %v378 = vld [vmem:[#allocation7 + $0x6c] sm:$0xf]
        %v379 = vld [vmem:[#allocation7 + $0x70] sm:$0xf]
        %v380 = vld [vmem:[#allocation7 + $0x74] sm:$0xf]
        %v381 = vld [vmem:[#allocation7 + $0x78] sm:$0xf]
        %v382 = vld [vmem:[#allocation7 + $0x7c] sm:$0xf]
        %v383 = vld [vmem:[#allocation7 + $0x80] sm:$0xf]
        %v384 = vld [vmem:[#allocation7 + $0x84] sm:$0xf]
        %v385 = vld [vmem:[#allocation7 + $0x88] sm:$0xf]
        %v386 = vld [vmem:[#allocation7 + $0x8c] sm:$0xf]
        %v387 = vld [vmem:[#allocation7 + $0x90] sm:$0xf]
        %v388 = vld [vmem:[#allocation7 + $0x94] sm:$0xf]
        %v389 = vld [vmem:[#allocation7 + $0x98] sm:$0xf]
        %v390 = vld [vmem:[#allocation7 + $0x9c] sm:$0xf]
        %v391 = vld [vmem:[#allocation7 + $0xa0] sm:$0xf]
        %v392 = vld [vmem:[#allocation7 + $0xa4] sm:$0xf]
        %v393 = vld [vmem:[#allocation7 + $0xa8] sm:$0xf]
        %v394 = vld [vmem:[#allocation7 + $0xac] sm:$0xf]
        %v395 = vld [vmem:[#allocation7 + $0xb0] sm:$0xf]
        %v396 = vld [vmem:[#allocation7 + $0xb4] sm:$0xf]
        %v397 = vld [vmem:[#allocation7 + $0xb8] sm:$0xf]
        %v398 = vld [vmem:[#allocation7 + $0xbc] sm:$0xf]
        %v399 = vld [vmem:[#allocation7 + $0xc0] sm:$0xf]
        %v400 = vld [vmem:[#allocation7 + $0xc4] sm:$0xf]
        %v401 = vld [vmem:[#allocation7 + $0xc8] sm:$0xf]
        %v402 = vld [vmem:[#allocation7 + $0xcc] sm:$0xf]
        %v403 = vld [vmem:[#allocation7 + $0xd0] sm:$0xf]
        %v404 = vld [vmem:[#allocation7 + $0xd4] sm:$0xf]
        %v405 = vld [vmem:[#allocation7 + $0xd8] sm:$0xf]
        %v406 = vld [vmem:[#allocation7 + $0xdc] sm:$0xf]
        %v407 = vld [vmem:[#allocation7 + $0xe0] sm:$0xf]
        %v408 = vld [vmem:[#allocation7 + $0xe4] sm:$0xf]
        %v409 = vld [vmem:[#allocation7 + $0xe8] sm:$0xf]
        %v410 = vld [vmem:[#allocation7 + $0xec] sm:$0xf]
        %v411 = vld [vmem:[#allocation7 + $0xf0] sm:$0xf]
        %v412 = vld [vmem:[#allocation7 + $0xf4] sm:$0xf]
        %v413 = vld [vmem:[#allocation7 + $0xf8] sm:$0xf]
        %v414 = vld [vmem:[#allocation7 + $0xfc] sm:$0xf]
        %v415 = vld [vmem:[#allocation7 + $0x100] sm:$0xf]
        %v416 = vld [vmem:[#allocation7 + $0x104] sm:$0xf]
        %v417 = vld [vmem:[#allocation7 + $0x108] sm:$0xf]
        %v418 = vld [vmem:[#allocation7 + $0x10c] sm:$0xf]
        %v419 = vld [vmem:[#allocation7 + $0x110] sm:$0xf]
        %v420 = vld [vmem:[#allocation7 + $0x114] sm:$0xf]
        %v421 = vld [vmem:[#allocation7 + $0x118] sm:$0xf]
        %v422 = vld [vmem:[#allocation7 + $0x11c] sm:$0xf]
        %v423 = vld [vmem:[#allocation7 + $0x120] sm:$0xf]
        %v424 = vld [vmem:[#allocation7 + $0x124] sm:$0xf]
        %v425 = vld [vmem:[#allocation7 + $0x128] sm:$0xf]
        %v426 = vld [vmem:[#allocation7 + $0x12c] sm:$0xf]
        %v427 = vld [vmem:[#allocation7 + $0x130] sm:$0xf]
        %v428 = vld [vmem:[#allocation7 + $0x134] sm:$0xf]
        %v429 = vld [vmem:[#allocation7 + $0x138] sm:$0xf]
        %v430 = vld [vmem:[#allocation7 + $0x13c] sm:$0xf]
        %v431 = vld [vmem:[#allocation7 + $0x140] sm:$0xf]
        %v432 = vld [vmem:[#allocation7 + $0x144] sm:$0xf]
        %v433 = vld [vmem:[#allocation7 + $0x148] sm:$0xf]
        %v434 = vld [vmem:[#allocation7 + $0x14c] sm:$0xf]
        %v435 = vld [vmem:[#allocation7 + $0x150] sm:$0xf]
        %v436 = vld [vmem:[#allocation7 + $0x154] sm:$0xf]
        %v437 = vld [vmem:[#allocation7 + $0x158] sm:$0xf]
        %v438 = vld [vmem:[#allocation7 + $0x15c] sm:$0xf]
        %v439 = vld [vmem:[#allocation7 + $0x160] sm:$0xf]
        %v440 = vld [vmem:[#allocation7 + $0x164] sm:$0xf]
        %v441 = vld [vmem:[#allocation7 + $0x168] sm:$0xf]
        %v442 = vld [vmem:[#allocation7 + $0x16c] sm:$0xf]
        %v443 = vld [vmem:[#allocation7 + $0x170] sm:$0xf]
        %v444 = vld [vmem:[#allocation7 + $0x174] sm:$0xf]
        %v445 = vld [vmem:[#allocation7 + $0x178] sm:$0xf]
        %v446 = vld [vmem:[#allocation7 + $0x17c] sm:$0xf]
        %v447 = vld [vmem:[#allocation7 + $0x180] sm:$0xf]
        %v448 = vld [vmem:[#allocation7 + $0x184] sm:$0xf]
        %v449 = vld [vmem:[#allocation7 + $0x188] sm:$0xf]
        %v450 = vld [vmem:[#allocation7 + $0x18c] sm:$0xf]
        %v451 = vld [vmem:[#allocation7 + $0x190] sm:$0xf]
        %v452 = vld [vmem:[#allocation7 + $0x194] sm:$0xf]
        %v453 = vld [vmem:[#allocation7 + $0x198] sm:$0xf]
        %v454 = vld [vmem:[#allocation7 + $0x19c] sm:$0xf]
        %v455 = vld [vmem:[#allocation7 + $0x1a0] sm:$0xf]
        %v456 = vld [vmem:[#allocation7 + $0x1a4] sm:$0xf]
        %v457 = vld [vmem:[#allocation7 + $0x1a8] sm:$0xf]
        %v458 = vld [vmem:[#allocation7 + $0x1ac] sm:$0xf]
        %v459 = vld [vmem:[#allocation7 + $0x1b0] sm:$0xf]
        %v460 = vld [vmem:[#allocation7 + $0x1b4] sm:$0xf]
        %v461 = vld [vmem:[#allocation7 + $0x1b8] sm:$0xf]
        %v462 = vld [vmem:[#allocation7 + $0x1bc] sm:$0xf]
        %v463 = vld [vmem:[#allocation7 + $0x1c0] sm:$0xf]
        %v464 = vld [vmem:[#allocation7 + $0x1c4] sm:$0xf]
        %v465 = vld [vmem:[#allocation7 + $0x1c8] sm:$0xf]
        %v466 = vld [vmem:[#allocation7 + $0x1cc] sm:$0xf]
        %v467 = vld [vmem:[#allocation7 + $0x1d0] sm:$0xf]
        %v468 = vld [vmem:[#allocation7 + $0x1d4] sm:$0xf]
        %v469 = vld [vmem:[#allocation7 + $0x1d8] sm:$0xf]
        %v470 = vld [vmem:[#allocation7 + $0x1dc] sm:$0xf]
        %v471 = vld [vmem:[#allocation7 + $0x1e0] sm:$0xf]
        %v472 = vld [vmem:[#allocation7 + $0x1e4] sm:$0xf]
        %v473 = vld [vmem:[#allocation7 + $0x1e8] sm:$0xf]
        %v474 = vld [vmem:[#allocation7 + $0x1ec] sm:$0xf]
        %v475 = vld [vmem:[#allocation7 + $0x1f0] sm:$0xf]
        %v476 = vld [vmem:[#allocation7 + $0x1f4] sm:$0xf]
        %v477 = vld [vmem:[#allocation7 + $0x1f8] sm:$0xf]
        %v478 = vld [vmem:[#allocation7 + $0x1fc] sm:$0xf]
        %v607 = vunpack.c.l.b16 %v351
        %v608 = vunpack.c.l.b16 %v352
        %v609 = vunpack.c.l.b16 %v353
        %v610 = vunpack.c.l.b16 %v354
        %v611 = vunpack.c.l.b16 %v355
        %v612 = vunpack.c.l.b16 %v356
        %v613 = vunpack.c.l.b16 %v357
        %v614 = vunpack.c.l.b16 %v358
        %v615 = vunpack.c.l.b16 %v359
        %v616 = vunpack.c.l.b16 %v360
        %v617 = vunpack.c.l.b16 %v361
        %v618 = vunpack.c.l.b16 %v362
        %v619 = vunpack.c.l.b16 %v363
        %v620 = vunpack.c.l.b16 %v364
        %v621 = vunpack.c.l.b16 %v365
        %v622 = vunpack.c.l.b16 %v366
        %v623 = vunpack.c.l.b16 %v367
        %v624 = vunpack.c.l.b16 %v368
        %v625 = vunpack.c.l.b16 %v369
        %v626 = vunpack.c.l.b16 %v370
        %v627 = vunpack.c.l.b16 %v371
        %v628 = vunpack.c.l.b16 %v372
        %v629 = vunpack.c.l.b16 %v373
        %v630 = vunpack.c.l.b16 %v374
        %v631 = vunpack.c.l.b16 %v375
        %v632 = vunpack.c.l.b16 %v376
        %v633 = vunpack.c.l.b16 %v377
        %v634 = vunpack.c.l.b16 %v378
        %v635 = vunpack.c.l.b16 %v379
        %v636 = vunpack.c.l.b16 %v380
        %v637 = vunpack.c.l.b16 %v381
        %v638 = vunpack.c.l.b16 %v382
        %v639 = vunpack.c.l.b16 %v383
        %v640 = vunpack.c.l.b16 %v384
        %v641 = vunpack.c.l.b16 %v385
        %v642 = vunpack.c.l.b16 %v386
        %v643 = vunpack.c.l.b16 %v387
        %v644 = vunpack.c.l.b16 %v388
        %v645 = vunpack.c.l.b16 %v389
        %v646 = vunpack.c.l.b16 %v390
        %v647 = vunpack.c.l.b16 %v391
        %v648 = vunpack.c.l.b16 %v392
        %v649 = vunpack.c.l.b16 %v393
        %v650 = vunpack.c.l.b16 %v394
        %v651 = vunpack.c.l.b16 %v395
        %v652 = vunpack.c.l.b16 %v396
        %v653 = vunpack.c.l.b16 %v397
        %v654 = vunpack.c.l.b16 %v398
        %v655 = vunpack.c.l.b16 %v399
        %v656 = vunpack.c.l.b16 %v400
        %v657 = vunpack.c.l.b16 %v401
        %v658 = vunpack.c.l.b16 %v402
        %v659 = vunpack.c.l.b16 %v403
        %v660 = vunpack.c.l.b16 %v404
        %v661 = vunpack.c.l.b16 %v405
        %v662 = vunpack.c.l.b16 %v406
        %v663 = vunpack.c.l.b16 %v407
        %v664 = vunpack.c.l.b16 %v408
        %v665 = vunpack.c.l.b16 %v409
        %v666 = vunpack.c.l.b16 %v410
        %v667 = vunpack.c.l.b16 %v411
        %v668 = vunpack.c.l.b16 %v412
        %v669 = vunpack.c.l.b16 %v413
        %v670 = vunpack.c.l.b16 %v414
        %v671 = vunpack.c.l.b16 %v415
        %v672 = vunpack.c.l.b16 %v416
        %v673 = vunpack.c.l.b16 %v417
        %v674 = vunpack.c.l.b16 %v418
        %v675 = vunpack.c.l.b16 %v419
        %v676 = vunpack.c.l.b16 %v420
        %v677 = vunpack.c.l.b16 %v421
        %v678 = vunpack.c.l.b16 %v422
        %v679 = vunpack.c.l.b16 %v423
        %v680 = vunpack.c.l.b16 %v424
        %v681 = vunpack.c.l.b16 %v425
        %v682 = vunpack.c.l.b16 %v426
        %v683 = vunpack.c.l.b16 %v427
        %v684 = vunpack.c.l.b16 %v428
        %v685 = vunpack.c.l.b16 %v429
        %v686 = vunpack.c.l.b16 %v430
        %v687 = vunpack.c.l.b16 %v431
        %v688 = vunpack.c.l.b16 %v432
        %v689 = vunpack.c.l.b16 %v433
        %v690 = vunpack.c.l.b16 %v434
        %v691 = vunpack.c.l.b16 %v435
        %v692 = vunpack.c.l.b16 %v436
        %v693 = vunpack.c.l.b16 %v437
        %v694 = vunpack.c.l.b16 %v438
        %v695 = vunpack.c.l.b16 %v439
        %v696 = vunpack.c.l.b16 %v440
        %v697 = vunpack.c.l.b16 %v441
        %v698 = vunpack.c.l.b16 %v442
        %v699 = vunpack.c.l.b16 %v443
        %v700 = vunpack.c.l.b16 %v444
        %v701 = vunpack.c.l.b16 %v445
        %v702 = vunpack.c.l.b16 %v446
        %v703 = vunpack.c.l.b16 %v447
        %v704 = vunpack.c.l.b16 %v448
        %v705 = vunpack.c.l.b16 %v449
        %v706 = vunpack.c.l.b16 %v450
        %v707 = vunpack.c.l.b16 %v451
        %v708 = vunpack.c.l.b16 %v452
        %v709 = vunpack.c.l.b16 %v453
        %v710 = vunpack.c.l.b16 %v454
        %v711 = vunpack.c.l.b16 %v455
        %v712 = vunpack.c.l.b16 %v456
        %v713 = vunpack.c.l.b16 %v457
        %v714 = vunpack.c.l.b16 %v458
        %v715 = vunpack.c.l.b16 %v459
        %v716 = vunpack.c.l.b16 %v460
        %v717 = vunpack.c.l.b16 %v461
        %v718 = vunpack.c.l.b16 %v462
        %v719 = vunpack.c.l.b16 %v463
        %v720 = vunpack.c.l.b16 %v464
        %v721 = vunpack.c.l.b16 %v465
        %v722 = vunpack.c.l.b16 %v466
        %v723 = vunpack.c.l.b16 %v467
        %v724 = vunpack.c.l.b16 %v468
        %v725 = vunpack.c.l.b16 %v469
        %v726 = vunpack.c.l.b16 %v470
        %v727 = vunpack.c.l.b16 %v471
        %v728 = vunpack.c.l.b16 %v472
        %v729 = vunpack.c.l.b16 %v473
        %v730 = vunpack.c.l.b16 %v474
        %v731 = vunpack.c.l.b16 %v475
        %v732 = vunpack.c.l.b16 %v476
        %v733 = vunpack.c.l.b16 %v477
        %v734 = vunpack.c.l.b16 %v478
        %v735 = vpack.c.b16 %v608, %v607
        %v736 = vpack.c.b16 %v610, %v609
        %v737 = vpack.c.b16 %v612, %v611
        %v738 = vpack.c.b16 %v614, %v613
        %v739 = vpack.c.b16 %v616, %v615
        %v740 = vpack.c.b16 %v618, %v617
        %v741 = vpack.c.b16 %v620, %v619
        %v742 = vpack.c.b16 %v622, %v621
        %v743 = vpack.c.b16 %v624, %v623
        %v744 = vpack.c.b16 %v626, %v625
        %v745 = vpack.c.b16 %v628, %v627
        %v746 = vpack.c.b16 %v630, %v629
        %v747 = vpack.c.b16 %v632, %v631
        %v748 = vpack.c.b16 %v634, %v633
        %v749 = vpack.c.b16 %v636, %v635
        %v750 = vpack.c.b16 %v638, %v637
        %v751 = vpack.c.b16 %v640, %v639
        %v752 = vpack.c.b16 %v642, %v641
        %v753 = vpack.c.b16 %v644, %v643
        %v754 = vpack.c.b16 %v646, %v645
        %v755 = vpack.c.b16 %v648, %v647
        %v756 = vpack.c.b16 %v650, %v649
        %v757 = vpack.c.b16 %v652, %v651
        %v758 = vpack.c.b16 %v654, %v653
        %v759 = vpack.c.b16 %v656, %v655
        %v760 = vpack.c.b16 %v658, %v657
        %v761 = vpack.c.b16 %v660, %v659
        %v762 = vpack.c.b16 %v662, %v661
        %v763 = vpack.c.b16 %v664, %v663
        %v764 = vpack.c.b16 %v666, %v665
        %v765 = vpack.c.b16 %v668, %v667
        %v766 = vpack.c.b16 %v670, %v669
        %v767 = vpack.c.b16 %v672, %v671
        %v768 = vpack.c.b16 %v674, %v673
        %v769 = vpack.c.b16 %v676, %v675
        %v770 = vpack.c.b16 %v678, %v677
        %v771 = vpack.c.b16 %v680, %v679
        %v772 = vpack.c.b16 %v682, %v681
        %v773 = vpack.c.b16 %v684, %v683
        %v774 = vpack.c.b16 %v686, %v685
        %v775 = vpack.c.b16 %v688, %v687
        %v776 = vpack.c.b16 %v690, %v689
        %v777 = vpack.c.b16 %v692, %v691
        %v778 = vpack.c.b16 %v694, %v693
        %v779 = vpack.c.b16 %v696, %v695
        %v780 = vpack.c.b16 %v698, %v697
        %v781 = vpack.c.b16 %v700, %v699
        %v782 = vpack.c.b16 %v702, %v701
        %v783 = vpack.c.b16 %v704, %v703
        %v784 = vpack.c.b16 %v706, %v705
        %v785 = vpack.c.b16 %v708, %v707
        %v786 = vpack.c.b16 %v710, %v709
        %v787 = vpack.c.b16 %v712, %v711
        %v788 = vpack.c.b16 %v714, %v713
        %v789 = vpack.c.b16 %v716, %v715
        %v790 = vpack.c.b16 %v718, %v717
        %v791 = vpack.c.b16 %v720, %v719
        %v792 = vpack.c.b16 %v722, %v721
        %v793 = vpack.c.b16 %v724, %v723
        %v794 = vpack.c.b16 %v726, %v725
        %v795 = vpack.c.b16 %v728, %v727
        %v796 = vpack.c.b16 %v730, %v729
        %v797 = vpack.c.b16 %v732, %v731
        %v798 = vpack.c.b16 %v734, %v733
        %863 = vmatprep.subr.bf16.mxu0 0
        %864 = vmatpush1.bf16.msra.mxu0 %v735
        %865 = vmatprep.subr.bf16.mxu0 0
        %866 = vmatpush1.bf16.msra.mxu0 %v736
        %867 = vmatprep.subr.bf16.mxu0 0
        %868 = vmatpush1.bf16.msra.mxu0 %v737
        %869 = vmatprep.subr.bf16.mxu0 0
        %870 = vmatpush1.bf16.msra.mxu0 %v738
        %871 = vmatprep.subr.bf16.mxu0 0
        %872 = vmatpush1.bf16.msra.mxu0 %v739
        %873 = vmatprep.subr.bf16.mxu0 0
        %874 = vmatpush1.bf16.msra.mxu0 %v740
        %875 = vmatprep.subr.bf16.mxu0 0
        %876 = vmatpush1.bf16.msra.mxu0 %v741
        %877 = vmatprep.subr.bf16.mxu0 0
        %878 = vmatpush1.bf16.msra.mxu0 %v742
        %879 = vmatprep.subr.bf16.mxu0 0
        %880 = vmatpush1.bf16.msra.mxu0 %v743
        %881 = vmatprep.subr.bf16.mxu0 0
        %882 = vmatpush1.bf16.msra.mxu0 %v744
        %883 = vmatprep.subr.bf16.mxu0 0
        %884 = vmatpush1.bf16.msra.mxu0 %v745
        %885 = vmatprep.subr.bf16.mxu0 0
        %886 = vmatpush1.bf16.msra.mxu0 %v746
        %887 = vmatprep.subr.bf16.mxu0 0
        %888 = vmatpush1.bf16.msra.mxu0 %v747
        %889 = vmatprep.subr.bf16.mxu0 0
        %890 = vmatpush1.bf16.msra.mxu0 %v748
        %891 = vmatprep.subr.bf16.mxu0 0
        %892 = vmatpush1.bf16.msra.mxu0 %v749
        %893 = vmatprep.subr.bf16.mxu0 0
        %894 = vmatpush1.bf16.msra.mxu0 %v750
        %895 = vmatprep.mubr.bf16.mxu0 %v344
        %896 = vmatmul.mubr.bf16.gmra.mrb[0].mxu0 %v343
        %v897 = vpop.f32.mrb[0].mxu0
        %v898 = vadd.f32 %v243, %v897
        %v899 = vpop.f32.mrb[0].mxu0
        %v900 = vpop.f32.mrb[0].mxu0
        %v901 = vpop.f32.mrb[0].mxu0
        %902 = vdwg.mxu0
        %903 = vmatprep.subr.bf16.mxu0 0
        %904 = vmatpush1.bf16.msra.mxu0 %v751
        %905 = vmatprep.subr.bf16.mxu0 0
        %906 = vmatpush1.bf16.msra.mxu0 %v752
        %907 = vmatprep.subr.bf16.mxu0 0
        %908 = vmatpush1.bf16.msra.mxu0 %v753
        %909 = vmatprep.subr.bf16.mxu0 0
        %910 = vmatpush1.bf16.msra.mxu0 %v754
        %911 = vmatprep.subr.bf16.mxu0 0
        %912 = vmatpush1.bf16.msra.mxu0 %v755
        %913 = vmatprep.subr.bf16.mxu0 0
        %914 = vmatpush1.bf16.msra.mxu0 %v756
        %915 = vmatprep.subr.bf16.mxu0 0
        %916 = vmatpush1.bf16.msra.mxu0 %v757
        %917 = vmatprep.subr.bf16.mxu0 0
        %918 = vmatpush1.bf16.msra.mxu0 %v758
        %919 = vmatprep.subr.bf16.mxu0 0
        %920 = vmatpush1.bf16.msra.mxu0 %v759
        %921 = vmatprep.subr.bf16.mxu0 0
        %922 = vmatpush1.bf16.msra.mxu0 %v760
        %923 = vmatprep.subr.bf16.mxu0 0
        %924 = vmatpush1.bf16.msra.mxu0 %v761
        %925 = vmatprep.subr.bf16.mxu0 0
        %926 = vmatpush1.bf16.msra.mxu0 %v762
        %927 = vmatprep.subr.bf16.mxu0 0
        %928 = vmatpush1.bf16.msra.mxu0 %v763
        %929 = vmatprep.subr.bf16.mxu0 0
        %930 = vmatpush1.bf16.msra.mxu0 %v764
        %931 = vmatprep.subr.bf16.mxu0 0
        %932 = vmatpush1.bf16.msra.mxu0 %v765
        %933 = vmatprep.subr.bf16.mxu0 0
        %934 = vmatpush1.bf16.msra.mxu0 %v766
        %935 = vmatprep.mubr.bf16.mxu0 %v346
        %936 = vmatmul.mubr.bf16.gmra.mrb[0].mxu0 %v345
        %v937 = vpop.f32.mrb[0].mxu0
        %v938 = vadd.f32 %v898, %v937
        %v939 = vpop.f32.mrb[0].mxu0
        %v940 = vpop.f32.mrb[0].mxu0
        %v941 = vpop.f32.mrb[0].mxu0
        %942 = vdwg.mxu0
        %943 = vmatprep.subr.bf16.mxu0 0
        %944 = vmatpush1.bf16.msra.mxu0 %v767
        %945 = vmatprep.subr.bf16.mxu0 0
        %946 = vmatpush1.bf16.msra.mxu0 %v768
        %947 = vmatprep.subr.bf16.mxu0 0
        %948 = vmatpush1.bf16.msra.mxu0 %v769
        %949 = vmatprep.subr.bf16.mxu0 0
        %950 = vmatpush1.bf16.msra.mxu0 %v770
        %951 = vmatprep.subr.bf16.mxu0 0
        %952 = vmatpush1.bf16.msra.mxu0 %v771
        %953 = vmatprep.subr.bf16.mxu0 0
        %954 = vmatpush1.bf16.msra.mxu0 %v772
        %955 = vmatprep.subr.bf16.mxu0 0
        %956 = vmatpush1.bf16.msra.mxu0 %v773
        %957 = vmatprep.subr.bf16.mxu0 0
        %958 = vmatpush1.bf16.msra.mxu0 %v774
        %959 = vmatprep.subr.bf16.mxu0 0
        %960 = vmatpush1.bf16.msra.mxu0 %v775
        %961 = vmatprep.subr.bf16.mxu0 0
        %962 = vmatpush1.bf16.msra.mxu0 %v776
        %963 = vmatprep.subr.bf16.mxu0 0
        %964 = vmatpush1.bf16.msra.mxu0 %v777
        %965 = vmatprep.subr.bf16.mxu0 0
        %966 = vmatpush1.bf16.msra.mxu0 %v778
        %967 = vmatprep.subr.bf16.mxu0 0
        %968 = vmatpush1.bf16.msra.mxu0 %v779
        %969 = vmatprep.subr.bf16.mxu0 0
        %970 = vmatpush1.bf16.msra.mxu0 %v780
        %971 = vmatprep.subr.bf16.mxu0 0
        %972 = vmatpush1.bf16.msra.mxu0 %v781
        %973 = vmatprep.subr.bf16.mxu0 0
        %974 = vmatpush1.bf16.msra.mxu0 %v782
        %975 = vmatprep.mubr.bf16.mxu0 %v348
        %976 = vmatmul.mubr.bf16.gmra.mrb[0].mxu0 %v347
        %v977 = vpop.f32.mrb[0].mxu0
        %v978 = vadd.f32 %v938, %v977
        %v979 = vpop.f32.mrb[0].mxu0
        %v980 = vpop.f32.mrb[0].mxu0
        %v981 = vpop.f32.mrb[0].mxu0
        %982 = vdwg.mxu0
        %983 = vmatprep.subr.bf16.mxu0 0
        %984 = vmatpush1.bf16.msra.mxu0 %v783
        %985 = vmatprep.subr.bf16.mxu0 0
        %986 = vmatpush1.bf16.msra.mxu0 %v784
        %987 = vmatprep.subr.bf16.mxu0 0
        %988 = vmatpush1.bf16.msra.mxu0 %v785
        %989 = vmatprep.subr.bf16.mxu0 0
        %990 = vmatpush1.bf16.msra.mxu0 %v786
        %991 = vmatprep.subr.bf16.mxu0 0
        %992 = vmatpush1.bf16.msra.mxu0 %v787
        %993 = vmatprep.subr.bf16.mxu0 0
        %994 = vmatpush1.bf16.msra.mxu0 %v788
        %995 = vmatprep.subr.bf16.mxu0 0
        %996 = vmatpush1.bf16.msra.mxu0 %v789
        %997 = vmatprep.subr.bf16.mxu0 0
        %998 = vmatpush1.bf16.msra.mxu0 %v790
        %999 = vmatprep.subr.bf16.mxu0 0
        %1000 = vmatpush1.bf16.msra.mxu0 %v791
        %1001 = vmatprep.subr.bf16.mxu0 0
        %1002 = vmatpush1.bf16.msra.mxu0 %v792
        %1003 = vmatprep.subr.bf16.mxu0 0
        %1004 = vmatpush1.bf16.msra.mxu0 %v793
        %1005 = vmatprep.subr.bf16.mxu0 0
        %1006 = vmatpush1.bf16.msra.mxu0 %v794
        %1007 = vmatprep.subr.bf16.mxu0 0
        %1008 = vmatpush1.bf16.msra.mxu0 %v795
        %1009 = vmatprep.subr.bf16.mxu0 0
        %1010 = vmatpush1.bf16.msra.mxu0 %v796
        %1011 = vmatprep.subr.bf16.mxu0 0
        %1012 = vmatpush1.bf16.msra.mxu0 %v797
        %1013 = vmatprep.subr.bf16.mxu0 0
        %1014 = vmatpush1.bf16.msra.mxu0 %v798
        %1015 = vmatprep.mubr.bf16.mxu0 %v350
        %1016 = vmatmul.mubr.bf16.gmra.mrb[0].mxu0 %v349
        %v1017 = vpop.f32.mrb[0].mxu0
        %v1018 = vadd.f32 %v978, %v1017
        %v1019 = vpop.f32.mrb[0].mxu0
        %v1020 = vpop.f32.mrb[0].mxu0
        %v1021 = vpop.f32.mrb[0].mxu0
        %1022 = vdwg.mxu0
        %1023 = vst [vmem:[%s240] sm:$0x1] %v1018
        %s1024 = sand.u32 %s119, 1
        %s1025 = scalar_lea.sflag [#allocation4], %s1024
        %s1026 = sand.u32 %s119, 1
        %s1027 = scalar_lea.vmem [#allocation8], %s1026
        // Predicated region
        $region49: #{tpu_custom_call.1} parent=35 // pred_check
          %p1028 = pneg %p129
        $region50: #{tpu_custom_call.1} parent=35 // pred_check_branch
          %1030 = sbr.rel (%p1028) target = $region52
        $region51: #{tpu_custom_call.1} parent=35 // pred_region
          %s1032 = ssub.s32 16, 16
          %1033 = vsyncadd %s1025, %s1032
          %s1034 = smul.addr %s22, 16
          %s1035 = scalar_lea.hbm %s4, %s1034
          %s1037 = sshll.u32 %s1027, 4
          %s1038 = int_to_ptr.vmem [resolvable:$true] %s1037
          %1040 = dma.vmem_to_hbm [thread:$0]  %s1038, 16, %s1035, %s1025
        $region52: #{tpu_custom_call.1} parent=35 // pred_fallthru
          _
      $region36: #{tpu_custom_call.1} parent=5 // pred_fallthru
        _
      %p1041 = scmp.le.s32.totalorder 2, %s17
      // Predicated region
      $region53: #{tpu_custom_call.1} parent=5 // pred_check
        %p1042 = pneg %p1041
      $region54: #{tpu_custom_call.1} parent=5 // pred_check_branch
        %1044 = sbr.rel (%p1042) target = $region56
      $region55: #{tpu_custom_call.1} parent=5 // pred_region
        %s1045 = ssub.s32 %s17, 2
        // Predicated region
        $region57: #{tpu_custom_call.1} parent=55 // pred_check
          %p1046 = pneg %p135
        $region58: #{tpu_custom_call.1} parent=55 // pred_check_branch
          %1048 = sbr.rel (%p1046) target = $region60
        $region59: #{tpu_custom_call.1} parent=55 // pred_region
          %s1049 = sand.u32 %s120, 1
          %s1050 = scalar_lea.sflag [#allocation4], %s1049
          %s1051 = sand.u32 %s120, 1
          %s1052 = scalar_lea.vmem [#allocation8], %s1051
          %1053 = dma.done %s1050, 16
        $region60: #{tpu_custom_call.1} parent=55 // pred_fallthru
          _
      $region56: #{tpu_custom_call.1} parent=5 // pred_fallthru
        _
    $region6: #{tpu_custom_call.1} parent=1 // loop_footer
      %s21 = sadd.s32 1, %s17
    $region7: #{tpu_custom_call.1} parent=1 // loop_footer_branch
      %16 = sbr.rel target = $region3
    $region8: #{tpu_custom_call.1} parent=1 // loop_exit
      _
    %1054 = vsyncpa [#allocation3], 1
    %s1055 = scalar_lea.sflag [#allocation3], 1
    %1056 = vsyncpa %s1055, 1
    %1057 = vsyncpa [#allocation6], 1
    %1058 = vsyncpa [#allocation4], 1
    %s1059 = scalar_lea.sflag [#allocation4], 1
    %1060 = vsyncpa %s1059, 1

</llo_original>
